<compile_context>
chip_gen: v5e
topology: v5e:2x2
jax: 0.10.0
libtpu: 0.0.40
codegen_flags: <defaults>
</compile_context>

<pallas_src>
import jax
import jax.numpy as jnp
from jax.experimental import pallas as pl
from jax.experimental.pallas import tpu as pltpu

LANE = 128
MXU_WIDTH = 256      # v6e / v7x MXU tile width
HID_TILE = 512       # hidden-dim streaming tile
NEG_MASK = -1e30     # baked into padded bias columns of b2p


def _round_up(x, m):
    return ((x + m - 1) // m) * m


# ----------------------------------------------------------------------------- kernel

def classifier_kernel(x_ref, w1_ref, b1_ref, w2_ref, b2_ref, o_ref, acc_ref):
    # x_ref : (b_tile, D_total) f32   (last timestep, full feature row)
    # w1_ref: (D_total, tk)     bf16  (hidden-column tile; unused feature rows are 0)
    # b1_ref: (1, tk)           f32
    # w2_ref: (tk, out_pad)     bf16  (hidden-row tile)
    # b2_ref: (1, out_pad)      f32   (padded class columns pre-set to -1e30)
    # o_ref : (b_tile, out_pad) f32   (lane-dense softmax slab)
    # acc_ref:(b_tile, out_pad) f32   (logit accumulator across hidden tiles)
    k = pl.program_id(1)

    @pl.when(k == 0)
    def _init():
        acc_ref[...] = jnp.zeros_like(acc_ref)

    # linear1 (this hidden tile) + ReLU; dropout layers are identity in eval mode.
    x = x_ref[...].astype(jnp.bfloat16)
    h1 = jnp.dot(x, w1_ref[...], preferred_element_type=jnp.float32) + b1_ref[...]
    h1 = jnp.maximum(h1, 0.0)

    # linear3 partial product for this hidden tile, accumulated in f32.
    acc_ref[...] += jnp.dot(h1.astype(jnp.bfloat16), w2_ref[...],
                            preferred_element_type=jnp.float32)

    @pl.when(k == pl.num_programs(1) - 1)
    def _finalize():
        # Padded class columns get -1e30 from the bias -> exp underflows to 0.
        logits = acc_ref[...] + b2_ref[...]
        m = jnp.max(logits, axis=-1, keepdims=True)
        e = jnp.exp(logits - m)
        # Exact normalization (f32 divide) so rows sum to 1 to f32 precision.
        o_ref[...] = e / jnp.sum(e, axis=-1, keepdims=True)


# ----------------------------------------------------------------------------- wrapper

def _vmem_estimate(b_tile, d_in, tk, out_pad):
    """Rough per-call VMEM footprint (double-buffered inputs/outputs + temps)."""
    x = 2 * b_tile * d_in * 4
    w1 = 2 * d_in * tk * 2
    b1 = 2 * tk * 4
    w2 = 2 * tk * out_pad * 2
    b2 = 2 * out_pad * 4
    out = 2 * b_tile * out_pad * 4
    acc = b_tile * out_pad * 4
    tmp = b_tile * tk * 6 + b_tile * out_pad * 12   # h1 (f32 + bf16), softmax temps
    return x + w1 + b1 + w2 + b2 + out + acc + tmp


def _choose_batch_tile(B, batch_tile):
    bt = min(batch_tile, B)
    if B > 8:
        # Guarantee >=2 batch grid steps so the "parallel" axis can be split
        # across v7x's two TensorCores (and the x/out DMAs can pipeline).
        bt = max(8, min(bt, _round_up(pl.cdiv(B, 2), 8)))
    return bt


def classifier_forward(input_, padded_params, output_size, *, batch_tile=256):
    """input_: (B, T, D_total) f32. Returns softmax probs (B, output_size) f32."""
    w1p, b1p, w2p, b2p = padded_params
    B, T, D_total = input_.shape
    d_in, hid_pad = w1p.shape
    out_pad = w2p.shape[1]
    assert d_in == D_total, "w1p must be padded to the input feature width"

    # Last-timestep slice in the XLA wrapper (rows are tiny; a fused strided DMA
    # would be descriptor-bound).  The :lm_hidden slice is folded into w1p.
    x_last = input_[:, -1, :]                     # (B, D_total)

    tk = min(hid_pad, HID_TILE)
    assert hid_pad % tk == 0
    num_k = hid_pad // tk

    # Batch tile: default 256, shrunk to fit a VMEM working budget.
    b_tile = _choose_batch_tile(B, batch_tile)
    vmem_budget = 24 << 20
    while b_tile > 8 and _vmem_estimate(b_tile, D_total, tk, out_pad) > vmem_budget:
        b_tile = max(8, b_tile // 2)
    num_b = pl.cdiv(B, b_tile)

    vmem_limit = int(min(max(_vmem_estimate(b_tile, D_total, tk, out_pad) + (4 << 20),
                             16 << 20), 64 << 20))

    flops = 2 * B * (D_total * hid_pad + hid_pad * out_pad)
    bytes_accessed = (B * D_total * 4 + w1p.size * 2 + w2p.size * 2
                      + b1p.size * 4 + b2p.size * 4 + B * out_pad * 4)

    out_padded = pl.pallas_call(
        classifier_kernel,
        out_shape=jax.ShapeDtypeStruct((B, out_pad), jnp.float32),
        grid=(num_b, num_k),
        in_specs=[
            pl.BlockSpec((b_tile, D_total), lambda i, k: (i, 0)),   # x (revisited over k)
            pl.BlockSpec((D_total, tk), lambda i, k: (0, k)),       # w1 column tile
            pl.BlockSpec((1, tk), lambda i, k: (0, k)),             # b1 tile
            pl.BlockSpec((tk, out_pad), lambda i, k: (k, 0)),       # w2 row tile
            pl.BlockSpec((1, out_pad), lambda i, k: (0, 0)),        # b2 (constant)
        ],
        out_specs=pl.BlockSpec((b_tile, out_pad), lambda i, k: (i, 0)),
        scratch_shapes=[pltpu.VMEM((b_tile, out_pad), jnp.float32)],
        compiler_params=pltpu.CompilerParams(
            dimension_semantics=("parallel", "arbitrary"),
            vmem_limit_bytes=vmem_limit),
        cost_estimate=pl.CostEstimate(flops=flops,
                                      transcendentals=B * out_pad,
                                      bytes_accessed=bytes_accessed),
    )(x_last, w1p, b1p, w2p, b2p)

    # Drop lane padding (glue only; the kernel store itself is lane-dense).
    return out_padded[:, :output_size]


# ----------------------------------------------------------------------------- params

def init_params(key, lm_hidden_size, hidden_size, output_size):
    """PyTorch nn.Linear-style uniform init; weights stored (in, out) for x @ W."""
    k1, k2, k3, k4 = jax.random.split(key, 4)
    bound1 = 1.0 / jnp.sqrt(lm_hidden_size)
    bound2 = 1.0 / jnp.sqrt(hidden_size)
    w1 = jax.random.uniform(k1, (lm_hidden_size, hidden_size), jnp.float32,
                            -bound1, bound1)
    b1 = jax.random.uniform(k2, (hidden_size,), jnp.float32, -bound1, bound1)
    w2 = jax.random.uniform(k3, (hidden_size, output_size), jnp.float32,
                            -bound2, bound2)
    b2 = jax.random.uniform(k4, (output_size,), jnp.float32, -bound2, bound2)
    return w1, b1, w2, b2


def prepare_params(params, input_feature_size):
    """Pad for the MXU and fold the :lm_hidden slice / class mask into the params.

    - w1 rows padded from lm_hidden to the full input feature width (zero rows),
      so the kernel needs no in-kernel lane slice.
    - hidden padded to a multiple of 256 (v6e/v7x MXU width) and, if large, to a
      multiple of the hidden streaming tile.
    - classes padded to a 128-lane multiple; padded b2 columns set to -1e30 so
      the softmax mask needs no per-step VPU work.
    - weights cast to bf16 for the MXU; biases stay f32.
    """
    w1, b1, w2, b2 = params
    lm_hidden, hidden = w1.shape
    out = w2.shape[1]
    assert input_feature_size >= lm_hidden

    hid_pad = _round_up(hidden, MXU_WIDTH)
    if hid_pad > HID_TILE:
        hid_pad = _round_up(hid_pad, HID_TILE)
    out_pad = _round_up(out, LANE)

    w1p = jnp.zeros((input_feature_size, hid_pad), jnp.bfloat16
                    ).at[:lm_hidden, :hidden].set(w1.astype(jnp.bfloat16))
    b1p = jnp.zeros((1, hid_pad), jnp.float32).at[0, :hidden].set(b1)
    w2p = jnp.zeros((hid_pad, out_pad), jnp.bfloat16
                    ).at[:hidden, :out].set(w2.astype(jnp.bfloat16))
    b2p = jnp.full((1, out_pad), NEG_MASK, jnp.float32).at[0, :out].set(b2)
    return w1p, b1p, w2p, b2p


def reference_forward(input_, params, lm_hidden_size):
    """Pure-JAX f32 reference matching the PyTorch module (eval mode)."""
    w1, b1, w2, b2 = params
    x = input_[:, -1, :lm_hidden_size]
    h1 = jnp.maximum(x @ w1 + b1, 0.0)
    h3 = h1 @ w2 + b2
    return jax.nn.softmax(h3, axis=1)


if __name__ == "__main__":
    # Small shapes consistent with the module's forward:
    # input_ is (batch, seq, feat_total) with feat_total >= lm_hidden_size.
    B, T, D_total = 2, 8, 48
    lm_hidden_size, hidden_size, output_size = 32, 32, 8

    key = jax.random.PRNGKey(0)
    k_in, k_p = jax.random.split(key)
    input_ = jax.random.normal(k_in, (B, T, D_total), dtype=jnp.float32)
    params = init_params(k_p, lm_hidden_size, hidden_size, output_size)
    padded_params = prepare_params(params, D_total)

    out = classifier_forward(input_, padded_params, output_size)
    out = jax.block_until_ready(out)

    # sanity: shape, softmax rows sum to 1, matches f32 reference within bf16 tol
    assert out.shape == (B, output_size)
    assert jnp.allclose(jnp.sum(out, axis=1), 1.0, atol=1e-3), \
        float(jnp.max(jnp.abs(jnp.sum(out, axis=1) - 1.0)))
    ref = reference_forward(input_, params, lm_hidden_size)
    assert jnp.allclose(out, ref, atol=2e-2), float(jnp.max(jnp.abs(out - ref)))
    print("KERNEL_OK")
</pallas_src>

<mosaic_0001>
module attributes {stable_mosaic.version = 11 : i64} {
  func.func @classifier_kernel(%arg0: i32, %arg1: i32, %arg2: memref<2x48xf32, #tpu.memory_space<vmem>>, %arg3: memref<48x256xbf16, #tpu.memory_space<vmem>>, %arg4: memref<1x256xf32, #tpu.memory_space<vmem>>, %arg5: memref<256x128xbf16, #tpu.memory_space<vmem>>, %arg6: memref<1x128xf32, #tpu.memory_space<vmem>>, %arg7: memref<2x128xf32, #tpu.memory_space<vmem>>, %arg8: memref<2x128xf32, #tpu.memory_space<vmem>>) attributes {dimension_semantics = [#tpu.dimension_semantics<parallel>, #tpu.dimension_semantics<arbitrary>], iteration_bounds = array<i64: 1, 1>, scalar_prefetch = 0 : i64, scratch_operands = 1 : i64, tpu.core_type = #tpu.core_type<tc>, window_params = [{transform_indices = @transform_0, window_bounds = array<i64: 2, 48>}, {transform_indices = @transform_1, window_bounds = array<i64: 48, 256>}, {transform_indices = @transform_2, window_bounds = array<i64: 1, 256>}, {transform_indices = @transform_3, window_bounds = array<i64: 256, 128>}, {pipeline_mode = #tpu.pipeline_mode<synchronous>, transform_indices = @transform_4, window_bounds = array<i64: 1, 128>}, {transform_indices = @transform_5, window_bounds = array<i64: 2, 128>}]} {
    %c0_i32 = arith.constant 0 : i32
    %0 = arith.cmpi eq, %arg1, %c0_i32 : i32
    %1 = arith.extui %0 : i1 to i32
    %c0_i32_0 = arith.constant 0 : i32
    %2 = arith.cmpi ne, %1, %c0_i32_0 : i32
    scf.if %2 {
      %cst_16 = arith.constant 0.000000e+00 : f32
      %21 = vector.broadcast %cst_16 : f32 to vector<2x128xf32>
      %c0_17 = arith.constant 0 : index
      %c0_18 = arith.constant 0 : index
      %22 = vector.load %arg8[%c0_17, %c0_18] : memref<2x128xf32, #tpu.memory_space<vmem>>, vector<2x128xf32>
      tpu.vector_store %arg8[%c0_17, %c0_18], %21 {strides = array<i32>} : memref<2x128xf32, #tpu.memory_space<vmem>>, vector<2x128xf32>,
    } else {
    }
    %c0 = arith.constant 0 : index
    %c0_1 = arith.constant 0 : index
    %3 = vector.load %arg2[%c0, %c0_1] : memref<2x48xf32, #tpu.memory_space<vmem>>, vector<2x48xf32>
    %4 = arith.truncf %3 : vector<2x48xf32> to vector<2x48xbf16>
    %c0_2 = arith.constant 0 : index
    %c0_3 = arith.constant 0 : index
    %5 = vector.load %arg3[%c0_2, %c0_3] : memref<48x256xbf16, #tpu.memory_space<vmem>>, vector<48x256xbf16>
    %cst = arith.constant dense<0.000000e+00> : vector<2x256xf32>
    %6 = tpu.matmul %4, %5, %cst {dimension_numbers = #tpu.dot_dimension_numbers<[1], [0], [0], [1], [0, 0, 1, 1], [], []>} : vector<2x48xbf16>, vector<48x256xbf16>, vector<2x256xf32> -> vector<2x256xf32>
    %c0_4 = arith.constant 0 : index
    %c0_5 = arith.constant 0 : index
    %7 = vector.load %arg4[%c0_4, %c0_5] : memref<1x256xf32, #tpu.memory_space<vmem>>, vector<1x256xf32>
    %8 = vector.broadcast %7 : vector<1x256xf32> to vector<2x256xf32>
    %9 = arith.addf %6, %8 : vector<2x256xf32>
    %cst_6 = arith.constant 0.000000e+00 : f32
    %10 = vector.broadcast %cst_6 : f32 to vector<2x256xf32>
    %11 = arith.maximumf %9, %10 : vector<2x256xf32>
    %c0_7 = arith.constant 0 : index
    %c0_8 = arith.constant 0 : index
    %12 = vector.load %arg8[%c0_7, %c0_8] : memref<2x128xf32, #tpu.memory_space<vmem>>, vector<2x128xf32>
    %13 = arith.truncf %11 : vector<2x256xf32> to vector<2x256xbf16>
    %c0_9 = arith.constant 0 : index
    %c0_10 = arith.constant 0 : index
    %14 = vector.load %arg5[%c0_9, %c0_10] : memref<256x128xbf16, #tpu.memory_space<vmem>>, vector<256x128xbf16>
    %cst_11 = arith.constant dense<0.000000e+00> : vector<2x128xf32>
    %15 = tpu.matmul %13, %14, %cst_11 {dimension_numbers = #tpu.dot_dimension_numbers<[1], [0], [0], [1], [0, 0, 1, 1], [], []>} : vector<2x256xbf16>, vector<256x128xbf16>, vector<2x128xf32> -> vector<2x128xf32>
    %16 = arith.addf %12, %15 : vector<2x128xf32>
    %c0_12 = arith.constant 0 : index
    %c0_13 = arith.constant 0 : index
    %17 = vector.load %arg8[%c0_12, %c0_13] : memref<2x128xf32, #tpu.memory_space<vmem>>, vector<2x128xf32>
    tpu.vector_store %arg8[%c0_12, %c0_13], %16 {strides = array<i32>} : memref<2x128xf32, #tpu.memory_space<vmem>>, vector<2x128xf32>,
    %c0_i32_14 = arith.constant 0 : i32
    %18 = arith.cmpi eq, %arg1, %c0_i32_14 : i32
    %19 = arith.extui %18 : i1 to i32
    %c0_i32_15 = arith.constant 0 : i32
    %20 = arith.cmpi ne, %19, %c0_i32_15 : i32
    scf.if %20 {
      %c0_16 = arith.constant 0 : index
      %c0_17 = arith.constant 0 : index
      %21 = vector.load %arg8[%c0_16, %c0_17] : memref<2x128xf32, #tpu.memory_space<vmem>>, vector<2x128xf32>
      %c0_18 = arith.constant 0 : index
      %c0_19 = arith.constant 0 : index
      %22 = vector.load %arg6[%c0_18, %c0_19] : memref<1x128xf32, #tpu.memory_space<vmem>>, vector<1x128xf32>
      %23 = vector.broadcast %22 : vector<1x128xf32> to vector<2x128xf32>
      %24 = arith.addf %21, %23 : vector<2x128xf32>
      %cst_20 = arith.constant dense<0xFF800000> : vector<2xf32>
      %25 = vector.multi_reduction <maximumf>, %24, %cst_20 [1] : vector<2x128xf32> to vector<2xf32>
      %26 = vector.shape_cast %25 : vector<2xf32> to vector<2x1xf32>
      %27 = vector.broadcast %26 : vector<2x1xf32> to vector<2x128xf32>
      %28 = arith.subf %24, %27 : vector<2x128xf32>
      %29 = math.exp %28 : vector<2x128xf32>
      %cst_21 = arith.constant dense<0.000000e+00> : vector<2xf32>
      %30 = vector.multi_reduction <add>, %29, %cst_21 [1] : vector<2x128xf32> to vector<2xf32>
      %31 = vector.shape_cast %30 : vector<2xf32> to vector<2x1xf32>
      %32 = vector.broadcast %31 : vector<2x1xf32> to vector<2x128xf32>
      %33 = arith.divf %29, %32 : vector<2x128xf32>
      %c0_22 = arith.constant 0 : index
      %c0_23 = arith.constant 0 : index
      %34 = vector.load %arg7[%c0_22, %c0_23] : memref<2x128xf32, #tpu.memory_space<vmem>>, vector<2x128xf32>
      tpu.vector_store %arg7[%c0_22, %c0_23], %33 {strides = array<i32>} : memref<2x128xf32, #tpu.memory_space<vmem>>, vector<2x128xf32>,
    } else {
    }
    return
  }
  func.func @transform_0(%arg0: i32, %arg1: i32) -> (i32, i32) {
    %c0_i32 = arith.constant 0 : i32
    %c0_i32_0 = arith.constant 0 : i32
    return %arg0, %c0_i32 : i32, i32
  }
  func.func @transform_1(%arg0: i32, %arg1: i32) -> (i32, i32) {
    %c0_i32 = arith.constant 0 : i32
    %c0_i32_0 = arith.constant 0 : i32
    return %c0_i32, %arg1 : i32, i32
  }
  func.func @transform_2(%arg0: i32, %arg1: i32) -> (i32, i32) {
    %c0_i32 = arith.constant 0 : i32
    %c0_i32_0 = arith.constant 0 : i32
    return %c0_i32, %arg1 : i32, i32
  }
  func.func @transform_3(%arg0: i32, %arg1: i32) -> (i32, i32) {
    %c0_i32 = arith.constant 0 : i32
    %c0_i32_0 = arith.constant 0 : i32
    return %arg1, %c0_i32 : i32, i32
  }
  func.func @transform_4(%arg0: i32, %arg1: i32) -> (i32, i32) {
    %c0_i32 = arith.constant 0 : i32
    %c0_i32_0 = arith.constant 0 : i32
    %c0_i32_1 = arith.constant 0 : i32
    return %c0_i32, %c0_i32_0 : i32, i32
  }
  func.func @transform_5(%arg0: i32, %arg1: i32) -> (i32, i32) {
    %c0_i32 = arith.constant 0 : i32
    %c0_i32_0 = arith.constant 0 : i32
    return %arg0, %c0_i32 : i32, i32
  }
}

</mosaic_0001>

<llo_original>
// kernel: tpu_custom_call.1
$region0: #{tpu_custom_call.1}
  #allocation0 [shape = 'u32[]', space=smem, size = 0x4, offset = 0x4, fixed_abs, tag = 'smem constant byte address 0x4 - core index']
  #allocation1 [shape = 'u32[72,128]{1,0:T(1,128)}', space=vmem, size = 0x9000, scoped, tag = 'internal scratch']
  #allocation2 [shape = 'f32[2,128]{1,0:T(2,128)}', space=vmem, size = 0x400, scoped, tag = 'scratch operand']
  %s0 = inlined_call_operand.hbm [shape: f32[2,48], index: 0, kind: input, shape index: {}]
  %s1 = inlined_call_operand.hbm [shape: bf16[48,256], index: 1, kind: input, shape index: {}]
  %s2 = inlined_call_operand.hbm [shape: f32[1,256], index: 2, kind: input, shape index: {}]
  %s3 = inlined_call_operand.hbm [shape: bf16[256,128], index: 3, kind: input, shape index: {}]
  %s4 = inlined_call_operand.vmem [shape: f32[1,128], index: 4, kind: input, shape index: {}]
  %s5 = inlined_call_operand.hbm [shape: f32[2,128], index: 5, kind: output, shape index: {}]
  %s6 = sld [smem:[#allocation0]]
  $region54: #{tpu_custom_call.1} parent=0
    _
  %s8 = ssub.s32 1, %s6
  %s9 = scalar_select 0, %s8, %s6
  $region1: #{tpu_custom_call.1} parent=0
    #allocation3 [shape = 'u8[1024]{0}', space=vmem, size = 0x400, scoped, tag = 'input window, operand 0, single buffered']
    #allocation4 [shape = 's32[1]{0}', space=sflag, size = 0x4, scoped, tag = 'scoped memory for tpu_custom_call.1']
    #allocation5 [shape = 's32[1]{0}', space=sflag, size = 0x4, scoped, tag = 'scoped memory for tpu_custom_call.1']
    #allocation6 [shape = 'u8[24576]{0}', space=vmem, size = 0x6000, scoped, tag = 'input window, operand 1, single buffered']
    #allocation7 [shape = 's32[1]{0}', space=sflag, size = 0x4, scoped, tag = 'scoped memory for tpu_custom_call.1']
    #allocation8 [shape = 'u8[1024]{0}', space=vmem, size = 0x400, scoped, tag = 'input window, operand 2, single buffered']
    #allocation9 [shape = 'u8[65536]{0}', space=vmem, size = 0x10000, scoped, tag = 'input window, operand 3, single buffered']
    #allocation10 [shape = 's32[1]{0}', space=sflag, size = 0x4, scoped, tag = 'scoped memory for tpu_custom_call.1']
    #allocation11 [shape = 'u8[1024]{0}', space=vmem, size = 0x400, scoped, tag = 'output window, operand 0, single buffered']
    %10 = vsyncpa [#allocation4], 0
    %11 = vsyncpa [#allocation7], 0
    %12 = vsyncpa [#allocation10], 0
    %13 = vsyncpa [#allocation5], 0
    // Predicated region
    $region2: #{tpu_custom_call.1} parent=1 // pred_check
      _
    $region3: #{tpu_custom_call.1} parent=1 // pred_check_branch
      %15 = sbr.rel (0) target = $region5
    $region4: #{tpu_custom_call.1} parent=1 // pred_region
      %17 = vsyncadd [#allocation4], 0
      %s19 = sshll.u32 %s0, 4
      %s20 = int_to_ptr.hbm [resolvable:$true] %s19
      %s21 = sshll.u32 [#allocation3], 4
      %s22 = int_to_ptr.vmem [resolvable:$true] %s21
      %24 = dma.hbm_to_vmem [thread:$0]  %s20, 32, %s22, [#allocation4]
    $region5: #{tpu_custom_call.1} parent=1 // pred_fallthru
      _
    // Predicated region
    $region6: #{tpu_custom_call.1} parent=1 // pred_check
      _
    $region7: #{tpu_custom_call.1} parent=1 // pred_check_branch
      %26 = sbr.rel (0) target = $region9
    $region8: #{tpu_custom_call.1} parent=1 // pred_region
      %28 = vsyncadd [#allocation7], 0
      %s29 = sshll.u32 %s1, 4
      %s30 = int_to_ptr.hbm [resolvable:$true] %s29
      %s31 = sshll.u32 [#allocation6], 4
      %s32 = int_to_ptr.vmem [resolvable:$true] %s31
      %37 = dma.hbm_to_vmem [thread:$0]  %s30, 768, %s32, [#allocation7], 128, 128, 8
    $region9: #{tpu_custom_call.1} parent=1 // pred_fallthru
      _
    // Predicated region
    $region10: #{tpu_custom_call.1} parent=1 // pred_check
      _
    $region11: #{tpu_custom_call.1} parent=1 // pred_check_branch
      %39 = sbr.rel (0) target = $region13
    $region12: #{tpu_custom_call.1} parent=1 // pred_region
      %41 = vsyncadd [#allocation7], 0
      %s43 = sshll.u32 %s2, 4
      %s44 = int_to_ptr.hbm [resolvable:$true] %s43
      %s45 = sshll.u32 [#allocation8], 4
      %s46 = int_to_ptr.vmem [resolvable:$true] %s45
      %48 = dma.hbm_to_vmem [thread:$0]  %s44, 32, %s46, [#allocation7]
    $region13: #{tpu_custom_call.1} parent=1 // pred_fallthru
      _
    // Predicated region
    $region14: #{tpu_custom_call.1} parent=1 // pred_check
      _
    $region15: #{tpu_custom_call.1} parent=1 // pred_check_branch
      %50 = sbr.rel (0) target = $region17
    $region16: #{tpu_custom_call.1} parent=1 // pred_region
      %52 = vsyncadd [#allocation10], 0
      %s53 = sshll.u32 %s3, 4
      %s54 = int_to_ptr.hbm [resolvable:$true] %s53
      %s55 = sshll.u32 [#allocation9], 4
      %s56 = int_to_ptr.vmem [resolvable:$true] %s55
      %61 = dma.hbm_to_vmem [thread:$0]  %s54, 2048, %s56, [#allocation10], 64, 64, 4
    $region17: #{tpu_custom_call.1} parent=1 // pred_fallthru
      _
    // Predicated region
    $region18: #{tpu_custom_call.1} parent=1 // pred_check
      _
    $region19: #{tpu_custom_call.1} parent=1 // pred_check_branch
      %63 = sbr.rel (0) target = $region21
    $region20: #{tpu_custom_call.1} parent=1 // pred_region
      _
    $region21: #{tpu_custom_call.1} parent=1 // pred_fallthru
      _
    // Predicated region
    $region22: #{tpu_custom_call.1} parent=1 // pred_check
      _
    $region23: #{tpu_custom_call.1} parent=1 // pred_check_branch
      %65 = sbr.rel (0) target = $region25
    $region24: #{tpu_custom_call.1} parent=1 // pred_region
      %67 = dma.done [#allocation4], 32
    $region25: #{tpu_custom_call.1} parent=1 // pred_fallthru
      _
    // Predicated region
    $region26: #{tpu_custom_call.1} parent=1 // pred_check
      _
    $region27: #{tpu_custom_call.1} parent=1 // pred_check_branch
      %69 = sbr.rel (0) target = $region29
    $region28: #{tpu_custom_call.1} parent=1 // pred_region
      %71 = dma.done [#allocation7], 768
    $region29: #{tpu_custom_call.1} parent=1 // pred_fallthru
      _
    // Predicated region
    $region30: #{tpu_custom_call.1} parent=1 // pred_check
      _
    $region31: #{tpu_custom_call.1} parent=1 // pred_check_branch
      %73 = sbr.rel (0) target = $region33
    $region32: #{tpu_custom_call.1} parent=1 // pred_region
      %75 = dma.done [#allocation7], 32
    $region33: #{tpu_custom_call.1} parent=1 // pred_fallthru
      _
    // Predicated region
    $region34: #{tpu_custom_call.1} parent=1 // pred_check
      _
    $region35: #{tpu_custom_call.1} parent=1 // pred_check_branch
      %77 = sbr.rel (0) target = $region37
    $region36: #{tpu_custom_call.1} parent=1 // pred_region
      %79 = dma.done [#allocation10], 2048
    $region37: #{tpu_custom_call.1} parent=1 // pred_fallthru
      _
    %p81 = scmp.eq.s32.totalorder 0, 0
    // Predicated region
    $region38: #{tpu_custom_call.1} parent=1 // pred_check
      %p82 = pneg %p81
    $region39: #{tpu_custom_call.1} parent=1 // pred_check_branch
      %84 = sbr.rel (%p82) target = $region41
    $region40: #{tpu_custom_call.1} parent=1 // pred_region
      %85 = vst [vmem:[#allocation2] sm:$0x3] 0.0
    $region41: #{tpu_custom_call.1} parent=1 // pred_fallthru
      _
    %v86 = vld [vmem:[#allocation3] sm:$0x3]
    %v87 = vpack.c.bf16 %v86, %v86
    %v88 = vld [vmem:[#allocation6] sm:$0xff]
    %v89 = vld [vmem:[#allocation6 + $0x8] sm:$0xff]
    %v90 = vld [vmem:[#allocation6 + $0x10] sm:$0xff]
    %v91 = vld [vmem:[#allocation6 + $0x18] sm:$0xff]
    %v92 = vld [vmem:[#allocation6 + $0x20] sm:$0xff]
    %v93 = vld [vmem:[#allocation6 + $0x28] sm:$0xff]
    %v94 = vld [vmem:[#allocation8] sm:$0x3]
    %v96 = vperm.slane %v94, 0
    %v97 = vperm.slane %v94, 1
    %v106 = vunpack.c.l.b16 %v88
    %v107 = vunpack.c.h.b16 %v88
    %v108 = vunpack.c.l.b16 %v89
    %v109 = vunpack.c.h.b16 %v89
    %v110 = vunpack.c.l.b16 %v90
    %v111 = vunpack.c.h.b16 %v90
    %v112 = vunpack.c.l.b16 %v91
    %v113 = vunpack.c.h.b16 %v91
    %v114 = vunpack.c.l.b16 %v92
    %v115 = vunpack.c.h.b16 %v92
    %v116 = vunpack.c.l.b16 %v93
    %v117 = vunpack.c.h.b16 %v93
    %v118 = vpack.c.b16 %v108, %v106
    %v119 = vpack.c.b16 %v109, %v107
    %v120 = vpack.c.b16 %v112, %v110
    %v121 = vpack.c.b16 %v113, %v111
    %v122 = vpack.c.b16 %v116, %v114
    %v123 = vpack.c.b16 %v117, %v115
    %vm130 = vcmask 392192
    %v132 = vsel %vm130, %v87, 0
    %134 = vmatpush.bf16.msra.mxu0 0
    %135 = vmatpush.bf16.msra.mxu0 0
    %136 = vmatpush.bf16.msra.mxu0 0
    %137 = vmatpush.bf16.msra.mxu0 0
    %138 = vmatpush.bf16.msra.mxu0 0
    %139 = vmatpush.bf16.msra.mxu0 %v122
    %140 = vmatpush.bf16.msra.mxu0 %v120
    %141 = vmatpush.bf16.msra.mxu0 %v118
    %142 = vmatmul.bf16.gmra.mxu0 %v132
    %v143 = vpop.f32.mrf.mxu0
    %v144 = vadd.f32 %v96, %v143
    %v145 = vpop.f32.mrf.mxu0
    %146 = vdwg.mxu0
    %147 = vmatpush.bf16.msra.mxu0 0
    %148 = vmatpush.bf16.msra.mxu0 0
    %149 = vmatpush.bf16.msra.mxu0 0
    %150 = vmatpush.bf16.msra.mxu0 0
    %151 = vmatpush.bf16.msra.mxu0 0
    %152 = vmatpush.bf16.msra.mxu0 %v123
    %153 = vmatpush.bf16.msra.mxu0 %v121
    %154 = vmatpush.bf16.msra.mxu0 %v119
    %155 = vmatmul.bf16.gmra.mxu0 %v132
    %v156 = vpop.f32.mrf.mxu0
    %v157 = vadd.f32 %v97, %v156
    %v158 = vpop.f32.mrf.mxu0
    %159 = vdwg.mxu0
    %v160 = vmax.f32 %v144, 0.0
    %v161 = vmax.f32 %v157, 0.0
    %v162 = vld [vmem:[#allocation2] sm:$0x3]
    %v163 = vpack.c.bf16 %v160, %v160
    %v164 = vpack.c.bf16 %v161, %v161
    %v165 = vld [vmem:[#allocation9] sm:$0xf]
    %v166 = vld [vmem:[#allocation9 + $0x4] sm:$0xf]
    %v167 = vld [vmem:[#allocation9 + $0x8] sm:$0xf]
    %v168 = vld [vmem:[#allocation9 + $0xc] sm:$0xf]
    %v169 = vld [vmem:[#allocation9 + $0x10] sm:$0xf]
    %v170 = vld [vmem:[#allocation9 + $0x14] sm:$0xf]
    %v171 = vld [vmem:[#allocation9 + $0x18] sm:$0xf]
    %v172 = vld [vmem:[#allocation9 + $0x1c] sm:$0xf]
    %v173 = vld [vmem:[#allocation9 + $0x20] sm:$0xf]
    %v174 = vld [vmem:[#allocation9 + $0x24] sm:$0xf]
    %v175 = vld [vmem:[#allocation9 + $0x28] sm:$0xf]
    %v176 = vld [vmem:[#allocation9 + $0x2c] sm:$0xf]
    %v177 = vld [vmem:[#allocation9 + $0x30] sm:$0xf]
    %v178 = vld [vmem:[#allocation9 + $0x34] sm:$0xf]
    %v179 = vld [vmem:[#allocation9 + $0x38] sm:$0xf]
    %v180 = vld [vmem:[#allocation9 + $0x3c] sm:$0xf]
    %v181 = vld [vmem:[#allocation9 + $0x40] sm:$0xf]
    %v182 = vld [vmem:[#allocation9 + $0x44] sm:$0xf]
    %v183 = vld [vmem:[#allocation9 + $0x48] sm:$0xf]
    %v184 = vld [vmem:[#allocation9 + $0x4c] sm:$0xf]
    %v185 = vld [vmem:[#allocation9 + $0x50] sm:$0xf]
    %v186 = vld [vmem:[#allocation9 + $0x54] sm:$0xf]
    %v187 = vld [vmem:[#allocation9 + $0x58] sm:$0xf]
    %v188 = vld [vmem:[#allocation9 + $0x5c] sm:$0xf]
    %v189 = vld [vmem:[#allocation9 + $0x60] sm:$0xf]
    %v190 = vld [vmem:[#allocation9 + $0x64] sm:$0xf]
    %v191 = vld [vmem:[#allocation9 + $0x68] sm:$0xf]
    %v192 = vld [vmem:[#allocation9 + $0x6c] sm:$0xf]
    %v193 = vld [vmem:[#allocation9 + $0x70] sm:$0xf]
    %v194 = vld [vmem:[#allocation9 + $0x74] sm:$0xf]
    %v195 = vld [vmem:[#allocation9 + $0x78] sm:$0xf]
    %v196 = vld [vmem:[#allocation9 + $0x7c] sm:$0xf]
    %v229 = vunpack.c.l.b16 %v165
    %v230 = vunpack.c.l.b16 %v166
    %v231 = vunpack.c.l.b16 %v167
    %v232 = vunpack.c.l.b16 %v168
    %v233 = vunpack.c.l.b16 %v169
    %v234 = vunpack.c.l.b16 %v170
    %v235 = vunpack.c.l.b16 %v171
    %v236 = vunpack.c.l.b16 %v172
    %v237 = vunpack.c.l.b16 %v173
    %v238 = vunpack.c.l.b16 %v174
    %v239 = vunpack.c.l.b16 %v175
    %v240 = vunpack.c.l.b16 %v176
    %v241 = vunpack.c.l.b16 %v177
    %v242 = vunpack.c.l.b16 %v178
    %v243 = vunpack.c.l.b16 %v179
    %v244 = vunpack.c.l.b16 %v180
    %v245 = vunpack.c.l.b16 %v181
    %v246 = vunpack.c.l.b16 %v182
    %v247 = vunpack.c.l.b16 %v183
    %v248 = vunpack.c.l.b16 %v184
    %v249 = vunpack.c.l.b16 %v185
    %v250 = vunpack.c.l.b16 %v186
    %v251 = vunpack.c.l.b16 %v187
    %v252 = vunpack.c.l.b16 %v188
    %v253 = vunpack.c.l.b16 %v189
    %v254 = vunpack.c.l.b16 %v190
    %v255 = vunpack.c.l.b16 %v191
    %v256 = vunpack.c.l.b16 %v192
    %v257 = vunpack.c.l.b16 %v193
    %v258 = vunpack.c.l.b16 %v194
    %v259 = vunpack.c.l.b16 %v195
    %v260 = vunpack.c.l.b16 %v196
    %v261 = vpack.c.b16 %v230, %v229
    %v262 = vpack.c.b16 %v232, %v231
    %v263 = vpack.c.b16 %v234, %v233
    %v264 = vpack.c.b16 %v236, %v235
    %v265 = vpack.c.b16 %v238, %v237
    %v266 = vpack.c.b16 %v240, %v239
    %v267 = vpack.c.b16 %v242, %v241
    %v268 = vpack.c.b16 %v244, %v243
    %v269 = vpack.c.b16 %v246, %v245
    %v270 = vpack.c.b16 %v248, %v247
    %v271 = vpack.c.b16 %v250, %v249
    %v272 = vpack.c.b16 %v252, %v251
    %v273 = vpack.c.b16 %v254, %v253
    %v274 = vpack.c.b16 %v256, %v255
    %v275 = vpack.c.b16 %v258, %v257
    %v276 = vpack.c.b16 %v260, %v259
    %293 = vmatpush.bf16.msra.mxu0 %v268
    %294 = vmatpush.bf16.msra.mxu0 %v267
    %295 = vmatpush.bf16.msra.mxu0 %v266
    %296 = vmatpush.bf16.msra.mxu0 %v265
    %297 = vmatpush.bf16.msra.mxu0 %v264
    %298 = vmatpush.bf16.msra.mxu0 %v263
    %299 = vmatpush.bf16.msra.mxu0 %v262
    %300 = vmatpush.bf16.msra.mxu0 %v261
    %301 = vmatmul.bf16.gmra.mxu0 %v163
    %v302 = vpop.f32.mrf.mxu0
    %v303 = vadd.f32 0.0, %v302
    %v304 = vpop.f32.mrf.mxu0
    %305 = vdwg.mxu0
    %306 = vmatpush.bf16.msra.mxu0 %v276
    %307 = vmatpush.bf16.msra.mxu0 %v275
    %308 = vmatpush.bf16.msra.mxu0 %v274
    %309 = vmatpush.bf16.msra.mxu0 %v273
    %310 = vmatpush.bf16.msra.mxu0 %v272
    %311 = vmatpush.bf16.msra.mxu0 %v271
    %312 = vmatpush.bf16.msra.mxu0 %v270
    %313 = vmatpush.bf16.msra.mxu0 %v269
    %314 = vmatmul.bf16.gmra.mxu0 %v164
    %v315 = vpop.f32.mrf.mxu0
    %v316 = vadd.f32 %v303, %v315
    %v317 = vpop.f32.mrf.mxu0
    %318 = vdwg.mxu0
    %v319 = vadd.f32 %v162, %v316
    %320 = vst [vmem:[#allocation2] sm:$0x3] %v319
    // Predicated region
    $region42: #{tpu_custom_call.1} parent=1 // pred_check
      %p321 = pneg %p81
    $region43: #{tpu_custom_call.1} parent=1 // pred_check_branch
      %323 = sbr.rel (%p321) target = $region45
    $region44: #{tpu_custom_call.1} parent=1 // pred_region
      %v324 = vld [vmem:[#allocation2] sm:$0x3]
      %v325 = vld [vmem:[%s4] sm:$0x1]
      %v327 = vperm.slane %v325, 0
      %v329 = vadd.f32 %v324, %v327
      %vm330 = vcmask 1041408
      %v331 = vsel %vm330, %v329, -inf
      %332 = vmax.xlane.f32.xlu0 %v331
      %v333 = vpop.xlane.xlu0 %332
      %v334 = vsub.f32 %v329, %v333
      %v335 = vmul.f32 %v334, 1.442695
      %v336 = vpow.pop %v335
      %v337 = vsel %vm330, %v336, 0.0
      %338 = vadd.xlane.f32.xlu0 %v337
      %v339 = vpop.xlane.xlu0 %338
      %v340 = vrcp.pop %v339
      %v341 = vmul.f32 %v339, %v340
      %v342 = vsub.f32 1.0, %v341
      %v343 = vmul.f32 %v340, %v342
      %v344 = vadd.f32 %v340, %v343
      %vm345 = vweird.f32 %v339
      %vm346 = vweird.f32 %v340
      %vm347 = vmor %vm345, %vm346
      %v348 = vsel %vm347, %v340, %v344
      %v349 = vand.u32 2147483647, %v339
      %vm350 = vcmp.eq.f32.partialorder %v349, 8.507059e+37
      %v351 = vand.u32 %v339, 2147483648
      %v352 = vor.u32 1.1754944e-38, %v351
      %v353 = vsel %vm350, %v352, %v348
      %v354 = vmul.f32 %v336, %v353
      %355 = vst [vmem:[#allocation11] sm:$0x3] %v354
    $region45: #{tpu_custom_call.1} parent=1 // pred_fallthru
      _
    // Predicated region
    $region46: #{tpu_custom_call.1} parent=1 // pred_check
      _
    $region47: #{tpu_custom_call.1} parent=1 // pred_check_branch
      %357 = sbr.rel (0) target = $region49
    $region48: #{tpu_custom_call.1} parent=1 // pred_region
      %359 = vsyncadd [#allocation5], 0
      %s361 = sshll.u32 [#allocation11], 4
      %s362 = int_to_ptr.vmem [resolvable:$true] %s361
      %s363 = sshll.u32 %s5, 4
      %s364 = int_to_ptr.hbm [resolvable:$true] %s363
      %366 = dma.vmem_to_hbm [thread:$0]  %s362, 32, %s364, [#allocation5]
    $region49: #{tpu_custom_call.1} parent=1 // pred_fallthru
      _
    // Predicated region
    $region50: #{tpu_custom_call.1} parent=1 // pred_check
      _
    $region51: #{tpu_custom_call.1} parent=1 // pred_check_branch
      %368 = sbr.rel (0) target = $region53
    $region52: #{tpu_custom_call.1} parent=1 // pred_region
      %370 = dma.done [#allocation5], 32
    $region53: #{tpu_custom_call.1} parent=1 // pred_fallthru
      _
    %371 = vsyncpa [#allocation4], 1
    %372 = vsyncpa [#allocation7], 1
    %373 = vsyncpa [#allocation10], 1
    %374 = vsyncpa [#allocation5], 1

</llo_original>
